<compile_context>
chip_gen: v7x
topology: tpu7x:2x2x1
jax: 0.10.0
libtpu: 0.0.40
codegen_flags: <defaults>
</compile_context>

<pallas_src>
import functools

import jax
import jax.numpy as jnp
from jax.experimental import pallas as pl
from jax.experimental.pallas import tpu as pltpu

IGNORE_LABEL = -1
WEIGHT = 1.0          # module default (weight=None -> 1.0)
FROM_SIGMOID = False  # module default

_LANE = 128
# ~2 MiB f32-equivalent per input buffer: large enough to sit on the flat part
# of the tile-size/HBM-roofline curve, small enough that 2 inputs x 2 pipeline
# buffers fit comfortably on v5e/v6e (128 MiB VMEM) and v7x (64 MiB VMEM).
_DEFAULT_TILE_ELEMS = (2 * 1024 * 1024) // 4


def _round_up(x, m):
    return (x + m - 1) // m * m


def _sublane_multiple(*dtypes):
    """Row-tile alignment: 8 for 32-bit, 16 for 16-bit, 32 for 8-bit inputs."""
    packing = max(4 // jnp.dtype(d).itemsize for d in dtypes)
    return 8 * packing


def _pick_tile_n(rows, sub):
    """Row-tile size: multiple of `sub` (or the full dim), >=2 blocks when possible."""
    if rows < sub:
        return rows                      # full dim -> single (legal) block
    if rows < 2 * sub:
        return sub                       # 2 blocks, second one padded
    return min(64, max(sub, (rows // 2) // sub * sub))


def _sbce_kernel(pred_ref, label_ref, out_ref, *, row_len, tile_l, need_mask,
                 ignore_label, weight, from_sigmoid):
    k = pl.program_id(1)

    @pl.when(k == 0)
    def _():
        out_ref[...] = jnp.zeros_like(out_ref)

    pred = pred_ref[...].astype(jnp.float32)
    label = label_ref[...].astype(jnp.float32)

    if not from_sigmoid:
        # relu(pred) - pred*label + softplus(-|pred|)   (matches the module)
        loss = (jnp.maximum(pred, 0.0)
                - pred * label
                + jnp.log1p(jnp.exp(-jnp.abs(pred))))
    else:
        eps = 1e-12
        loss = -(jnp.log(pred + eps) * label
                 + jnp.log(1.0 - pred + eps) * (1.0 - label))

    # Ignore-label mask.  A single select at the end also discards any garbage
    # from padded lanes, so the label itself never needs to be zeroed first.
    valid = label != jnp.float32(ignore_label)
    if need_mask:
        # Compare the raw lane iota against the scalar remaining length
        # (no per-step vector add of k*tile_l).
        rem = row_len - k * tile_l
        col = jax.lax.broadcasted_iota(jnp.int32, loss.shape, 1)
        valid = jnp.logical_and(valid, col < rem)

    loss = jnp.where(valid, loss, 0.0)
    if weight != 1.0:                    # traced out for the default weight
        loss = loss * jnp.float32(weight)

    # Per-row partial sums accumulate directly in the f32 output block, which
    # stays resident in VMEM across the trailing "arbitrary" reduction axis.
    out_ref[...] += jnp.sum(loss, axis=1, keepdims=True)


def sigmoid_bce_loss(pred, label, *, max_tile_elems=_DEFAULT_TILE_ELEMS):
    """pred, label: (N, C, H, W) -> (N,) per-sample loss (mean over C, H, W)."""
    n = pred.shape[0]
    l = 1
    for d in pred.shape[1:]:
        l *= d
    assert label.size == pred.size, "label.view(pred.size()) requires equal numel"

    # Small-batch parallel split: view each sample as `split` contiguous virtual
    # rows (pure, free reshape) so the 'parallel' row axis has >= 2 blocks and
    # both v7x TensorCores get work; partial sums are recombined in the wrapper.
    split = 1
    if n < 16:
        for cand in (16, 8, 4, 2):
            if n * cand >= 16 and l % cand == 0 and l // cand >= 512:
                split = cand
                break
    rows, row_len = n * split, l // split

    # Native dtypes on both inputs (no wrapper-side cast / extra HBM round trip);
    # the kernel upcasts to f32.
    pred2d = pred.reshape(rows, row_len)
    label2d = label.reshape(rows, row_len)

    sub = _sublane_multiple(pred2d.dtype, label2d.dtype)
    tile_n = _pick_tile_n(rows, sub)
    tile_l = max(_LANE, (max_tile_elems // tile_n) // _LANE * _LANE)
    tile_l = min(tile_l, _round_up(row_len, _LANE))
    grid = (pl.cdiv(rows, tile_n), pl.cdiv(row_len, tile_l))
    need_mask = (row_len % tile_l) != 0

    pred_isz = jnp.dtype(pred2d.dtype).itemsize
    label_isz = jnp.dtype(label2d.dtype).itemsize
    tile_bytes = tile_n * tile_l * (pred_isz + label_isz)
    # 2x for double buffering + 2x headroom; capped so it is safe on v7x (64 MiB).
    vmem_limit = int(min(max(4 * tile_bytes + (1 << 20), 16 << 20), 40 << 20))

    cost = pl.CostEstimate(
        flops=8 * n * l,
        transcendentals=2 * n * l,
        bytes_accessed=n * l * (pred_isz + label_isz) + rows * 4,
    )

    kernel = functools.partial(
        _sbce_kernel, row_len=row_len, tile_l=tile_l, need_mask=need_mask,
        ignore_label=IGNORE_LABEL, weight=WEIGHT, from_sigmoid=FROM_SIGMOID)

    # NOTE: when `rows` is not a multiple of tile_n, the padded rows of the last
    # row block compute on garbage data; rows are independent and out-of-bounds
    # output rows are dropped at writeback, so the result is unaffected.
    partial = pl.pallas_call(
        kernel,
        out_shape=jax.ShapeDtypeStruct((rows, 1), jnp.float32),
        grid_spec=pltpu.PrefetchScalarGridSpec(
            num_scalar_prefetch=0,
            grid=grid,
            in_specs=[
                pl.BlockSpec((tile_n, tile_l), lambda i, k: (i, k)),
                pl.BlockSpec((tile_n, tile_l), lambda i, k: (i, k)),
            ],
            out_specs=pl.BlockSpec((tile_n, 1), lambda i, k: (i, 0)),
        ),
        compiler_params=pltpu.CompilerParams(
            dimension_semantics=("parallel", "arbitrary"),
            vmem_limit_bytes=vmem_limit,
        ),
        cost_estimate=cost,
    )(pred2d, label2d)

    # torch.mean over (C, H, W): the divisor is the full length, including
    # ignored positions (matches the module).
    per_sample = jnp.sum(partial.reshape(n, split), axis=1) / jnp.float32(l)
    return per_sample.astype(pred.dtype)


def _reference(pred, label):
    p = pred.reshape(pred.shape[0], -1).astype(jnp.float32)
    y = label.reshape(pred.shape[0], -1).astype(jnp.float32)
    sw = y != IGNORE_LABEL
    y = jnp.where(sw, y, 0.0)
    loss = jnp.maximum(p, 0.0) - p * y + jnp.log1p(jnp.exp(-jnp.abs(p)))
    loss = WEIGHT * jnp.where(sw, loss, 0.0)
    return jnp.mean(loss, axis=1)


if __name__ == "__main__":
    def make_case(key, shape, pred_dtype=jnp.float32, label_dtype=jnp.float32):
        k1, k2, k3 = jax.random.split(key, 3)
        pred = jax.random.normal(k1, shape, dtype=jnp.float32).astype(pred_dtype)
        label = (jax.random.uniform(k2, shape) > 0.5).astype(label_dtype)
        ignore = jax.random.uniform(k3, shape) < 0.1
        label = jnp.where(ignore, jnp.asarray(IGNORE_LABEL, label_dtype), label)
        return pred, label

    keys = jax.random.split(jax.random.PRNGKey(0), 5)

    # 1) Canonical small case (single tile, no split, no masking).
    pred, label = make_case(keys[0], (2, 4, 16, 16))
    out = sigmoid_bce_loss(pred, label)
    jax.block_until_ready(out)
    ref = _reference(pred, label)
    assert out.shape == (2,)
    assert jnp.allclose(out, ref, atol=1e-5, rtol=1e-5), (out, ref)

    # 2) Small batch, larger spatial: exercises the virtual-row split
    #    (>= 2 parallel row blocks) and wrapper-side recombination.
    pred, label = make_case(keys[1], (2, 4, 32, 32))
    out = sigmoid_bce_loss(pred, label)
    ref = _reference(pred, label)
    assert jnp.allclose(out, ref, atol=1e-5, rtol=1e-5), (out, ref)

    # 3) Forced-small tiles: multi-step reduction axis + masked (padded) last tile.
    pred, label = make_case(keys[2], (2, 4, 24, 24))
    out = sigmoid_bce_loss(pred, label, max_tile_elems=2048)
    ref = _reference(pred, label)
    assert jnp.allclose(out, ref, atol=1e-5, rtol=1e-5), (out, ref)

    # 4) Mixed dtypes: bf16 pred with f32 label (no wrapper-side cast).
    pred, label = make_case(keys[3], (10, 3, 16, 16), pred_dtype=jnp.bfloat16)
    out = sigmoid_bce_loss(pred, label)
    ref = _reference(pred, label)
    assert out.dtype == jnp.bfloat16
    assert jnp.allclose(out.astype(jnp.float32), ref, atol=2e-2, rtol=2e-2), (out, ref)

    # 5) Batch not a multiple of the row tile (padded rows in the last row block).
    pred, label = make_case(keys[4], (12, 1, 16, 16))
    out = sigmoid_bce_loss(pred, label)
    ref = _reference(pred, label)
    assert jnp.allclose(out, ref, atol=1e-5, rtol=1e-5), (out, ref)

    print("KERNEL_OK")
</pallas_src>

<mosaic_0001>
module attributes {stable_mosaic.version = 11 : i64} {
  func.func @_sbce_kernel(%arg0: i32, %arg1: i32, %arg2: memref<2x1024xf32, #tpu.memory_space<vmem>>, %arg3: memref<2x1024xf32, #tpu.memory_space<vmem>>, %arg4: memref<2x1xf32, #tpu.memory_space<vmem>>) attributes {dimension_semantics = [#tpu.dimension_semantics<parallel>, #tpu.dimension_semantics<arbitrary>], iteration_bounds = array<i64: 1, 1>, scalar_prefetch = 0 : i64, scratch_operands = 0 : i64, tpu.core_type = #tpu.core_type<tc>, window_params = [{transform_indices = @transform_0, window_bounds = array<i64: 2, 1024>}, {transform_indices = @transform_1, window_bounds = array<i64: 2, 1024>}, {transform_indices = @transform_2, window_bounds = array<i64: 2, 1>}]} {
    %c0_i32 = arith.constant 0 : i32
    %0 = arith.cmpi eq, %arg1, %c0_i32 : i32
    %1 = arith.extui %0 : i1 to i32
    %c0_i32_0 = arith.constant 0 : i32
    %2 = arith.cmpi ne, %1, %c0_i32_0 : i32
    scf.if %2 {
      %cst_12 = arith.constant 0.000000e+00 : f32
      %24 = vector.broadcast %cst_12 : f32 to vector<2x1xf32>
      %c0_13 = arith.constant 0 : index
      %c0_14 = arith.constant 0 : index
      %25 = vector.load %arg4[%c0_13, %c0_14] : memref<2x1xf32, #tpu.memory_space<vmem>>, vector<2x1xf32>
      tpu.vector_store %arg4[%c0_13, %c0_14], %24 {strides = array<i32>} : memref<2x1xf32, #tpu.memory_space<vmem>>, vector<2x1xf32>,
    } else {
    }
    %c0 = arith.constant 0 : index
    %c0_1 = arith.constant 0 : index
    %3 = vector.load %arg2[%c0, %c0_1] : memref<2x1024xf32, #tpu.memory_space<vmem>>, vector<2x1024xf32>
    %c0_2 = arith.constant 0 : index
    %c0_3 = arith.constant 0 : index
    %4 = vector.load %arg3[%c0_2, %c0_3] : memref<2x1024xf32, #tpu.memory_space<vmem>>, vector<2x1024xf32>
    %cst = arith.constant 0.000000e+00 : f32
    %5 = vector.broadcast %cst : f32 to vector<2x1024xf32>
    %6 = arith.maximumf %3, %5 : vector<2x1024xf32>
    %7 = arith.mulf %3, %4 : vector<2x1024xf32>
    %8 = arith.subf %6, %7 : vector<2x1024xf32>
    %9 = math.absf %3 : vector<2x1024xf32>
    %cst_4 = arith.constant 0.000000e+00 : f32
    %10 = vector.broadcast %cst_4 : f32 to vector<2x1024xf32>
    %11 = arith.subf %10, %9 : vector<2x1024xf32>
    %12 = math.exp %11 : vector<2x1024xf32>
    %13 = math.log1p %12 : vector<2x1024xf32>
    %14 = arith.addf %8, %13 : vector<2x1024xf32>
    %cst_5 = arith.constant -1.000000e+00 : f32
    %15 = vector.broadcast %cst_5 : f32 to vector<2x1024xf32>
    %16 = arith.cmpf one, %4, %15 : vector<2x1024xf32>
    %cst_6 = arith.constant 0.000000e+00 : f32
    %17 = vector.broadcast %cst_6 : f32 to vector<2x1024xf32>
    %18 = arith.select %16, %14, %17 : vector<2x1024xi1>, vector<2x1024xf32>
    %c0_7 = arith.constant 0 : index
    %c0_8 = arith.constant 0 : index
    %19 = vector.load %arg4[%c0_7, %c0_8] : memref<2x1xf32, #tpu.memory_space<vmem>>, vector<2x1xf32>
    %cst_9 = arith.constant dense<0.000000e+00> : vector<2xf32>
    %20 = vector.multi_reduction <add>, %18, %cst_9 [1] : vector<2x1024xf32> to vector<2xf32>
    %21 = vector.shape_cast %20 : vector<2xf32> to vector<2x1xf32>
    %22 = arith.addf %19, %21 : vector<2x1xf32>
    %c0_10 = arith.constant 0 : index
    %c0_11 = arith.constant 0 : index
    %23 = vector.load %arg4[%c0_10, %c0_11] : memref<2x1xf32, #tpu.memory_space<vmem>>, vector<2x1xf32>
    tpu.vector_store %arg4[%c0_10, %c0_11], %22 {strides = array<i32>} : memref<2x1xf32, #tpu.memory_space<vmem>>, vector<2x1xf32>,
    return
  }
  func.func @transform_0(%arg0: i32, %arg1: i32) -> (i32, i32) {
    %c0_i32 = arith.constant 0 : i32
    return %arg0, %arg1 : i32, i32
  }
  func.func @transform_1(%arg0: i32, %arg1: i32) -> (i32, i32) {
    %c0_i32 = arith.constant 0 : i32
    return %arg0, %arg1 : i32, i32
  }
  func.func @transform_2(%arg0: i32, %arg1: i32) -> (i32, i32) {
    %c0_i32 = arith.constant 0 : i32
    %c0_i32_0 = arith.constant 0 : i32
    return %arg0, %c0_i32 : i32, i32
  }
}

</mosaic_0001>

<llo_original>
// kernel: tpu_custom_call.1
$region0: #{tpu_custom_call.1}
  #allocation0 [shape = 'u32[]', space=smem, size = 0x4, offset = 0x4, fixed_abs, tag = 'smem constant byte address 0x4 - core index']
  #allocation1 [shape = 'u32[144,128]{1,0:T(1,128)}', space=vmem, size = 0x12000, scoped, tag = 'internal scratch']
  %s0 = inlined_call_operand.hbm [shape: f32[2,1024], index: 0, kind: input, shape index: {}]
  %s1 = inlined_call_operand.hbm [shape: f32[2,1024], index: 1, kind: input, shape index: {}]
  %s2 = inlined_call_operand.vmem [shape: f32[2,1], index: 2, kind: output, shape index: {}]
  %s3 = sld [smem:[#allocation0]]
  $region30: #{tpu_custom_call.1} parent=0
    _
  %s5 = ssub.s32 1, %s3
  %s6 = scalar_select 0, %s5, %s3
  $region1: #{tpu_custom_call.1} parent=0
    #allocation2 [shape = 'u8[8192]{0}', space=vmem, size = 0x2000, scoped, tag = 'input window, operand 0, single buffered']
    #allocation3 [shape = 's32[1]{0}', space=sflag, size = 0x4, scoped, tag = 'scoped memory for tpu_custom_call.1']
    #allocation4 [shape = 'u8[8192]{0}', space=vmem, size = 0x2000, scoped, tag = 'input window, operand 1, single buffered']
    #allocation5 [shape = 's32[1]{0}', space=sflag, size = 0x4, scoped, tag = 'scoped memory for tpu_custom_call.1']
    %7 = vsyncpa [#allocation3], 0
    %8 = vsyncpa [#allocation5], 0
    // Predicated region
    $region2: #{tpu_custom_call.1} parent=1 // pred_check
      _
    $region3: #{tpu_custom_call.1} parent=1 // pred_check_branch
      %10 = sbr.rel (0) target = $region5
    $region4: #{tpu_custom_call.1} parent=1 // pred_region
      %s12 = ssub.s32 256, 256
      %13 = vsyncadd [#allocation3], %s12
      %s15 = sshll.u32 [#allocation2], 4
      %s16 = int_to_ptr.vmem [resolvable:$true] %s15
      %18 = dma.hbm_to_vmem [thread:$0]  %s0, 256, %s16, [#allocation3]
    $region5: #{tpu_custom_call.1} parent=1 // pred_fallthru
      _
    // Predicated region
    $region6: #{tpu_custom_call.1} parent=1 // pred_check
      _
    $region7: #{tpu_custom_call.1} parent=1 // pred_check_branch
      %20 = sbr.rel (0) target = $region9
    $region8: #{tpu_custom_call.1} parent=1 // pred_region
      %s22 = ssub.s32 256, 256
      %23 = vsyncadd [#allocation5], %s22
      %s25 = sshll.u32 [#allocation4], 4
      %s26 = int_to_ptr.vmem [resolvable:$true] %s25
      %28 = dma.hbm_to_vmem [thread:$0]  %s1, 256, %s26, [#allocation5]
    $region9: #{tpu_custom_call.1} parent=1 // pred_fallthru
      _
    // Predicated region
    $region10: #{tpu_custom_call.1} parent=1 // pred_check
      _
    $region11: #{tpu_custom_call.1} parent=1 // pred_check_branch
      %30 = sbr.rel (0) target = $region13
    $region12: #{tpu_custom_call.1} parent=1 // pred_region
      %31 = dma.done [#allocation3], 256
    $region13: #{tpu_custom_call.1} parent=1 // pred_fallthru
      _
    // Predicated region
    $region14: #{tpu_custom_call.1} parent=1 // pred_check
      _
    $region15: #{tpu_custom_call.1} parent=1 // pred_check_branch
      %33 = sbr.rel (0) target = $region17
    $region16: #{tpu_custom_call.1} parent=1 // pred_region
      %34 = dma.done [#allocation5], 256
    $region17: #{tpu_custom_call.1} parent=1 // pred_fallthru
      _
    %p35 = scmp.eq.s32.totalorder 0, 0
    // Predicated region
    $region18: #{tpu_custom_call.1} parent=1 // pred_check
      %p36 = pneg %p35
    $region19: #{tpu_custom_call.1} parent=1 // pred_check_branch
      %38 = sbr.rel (%p36) target = $region21
    $region20: #{tpu_custom_call.1} parent=1 // pred_region
      %vm39 = vcmask 1024
      %40 = vst.msk [vmem:[%s2] sm:$0x3] %vm39, 0.0
    $region21: #{tpu_custom_call.1} parent=1 // pred_fallthru
      _
    %v41 = vld [vmem:[#allocation2] sm:$0xff]
    %v42 = vld [vmem:[#allocation2 + $0x8] sm:$0xff]
    %v43 = vld [vmem:[#allocation4] sm:$0xff]
    %v44 = vld [vmem:[#allocation4 + $0x8] sm:$0xff]
    %v45 = vmax.f32 %v41, 0.0
    %v46 = vmax.f32 %v42, 0.0
    %v47 = vmul.f32 %v41, %v43
    %v48 = vmul.f32 %v42, %v44
    %v49 = vsub.f32 %v45, %v47
    %v50 = vsub.f32 %v46, %v48
    %v51 = vand.u32 2147483647, %v41
    %v52 = vand.u32 2147483647, %v42
    %v53 = vsub.f32 0.0, %v51
    %v54 = vsub.f32 0.0, %v52
    %v55 = vmul.f32 %v53, 1.442695
    %v56 = vpow.pop %v55
    %v57 = vmul.f32 %v54, 1.442695
    %v58 = vpow.pop %v57
    %v59 = vadd.f32 %v56, 1.0
    %v60 = vlog2.pop %v59
    %v61 = vmul.f32 %v60, 0.6931472
    %v62 = vmul.f32 -0.5, %v56
    %v63 = vadd.f32 %v62, 1.0
    %v64 = vmul.f32 %v63, %v56
    %v65 = vand.u32 2147483647, %v56
    %vm66 = vcmp.lt.f32.partialorder %v65, 0.0004427343
    %v67 = vsel %vm66, %v64, %v61
    %v68 = vadd.f32 %v58, 1.0
    %v69 = vlog2.pop %v68
    %v70 = vmul.f32 %v69, 0.6931472
    %v71 = vmul.f32 -0.5, %v58
    %v72 = vadd.f32 %v71, 1.0
    %v73 = vmul.f32 %v72, %v58
    %v74 = vand.u32 2147483647, %v58
    %vm75 = vcmp.lt.f32.partialorder %v74, 0.0004427343
    %v76 = vsel %vm75, %v73, %v70
    %v77 = vadd.f32 %v49, %v67
    %v78 = vadd.f32 %v50, %v76
    %vm79 = vcmp.ne.f32.partialorder %v43, -1.0
    %vm80 = vcmp.ne.f32.partialorder %v44, -1.0
    %v81 = vsel %vm79, %v77, 0.0
    %v82 = vsel %vm80, %v78, 0.0
    %v83 = vld [vmem:[%s2] sm:$0x3]
    %v86 = vcombine.high %v81, %v81
    %v88 = vunpack.c.l.s4 1983009808
    %v89 = vunpack.c.0.s8 %v88
    %v90 = vlaneseq
    %v91 = vshrl.u32 %v90, 7
    %v92 = vsub.s32 %v89, %v91
    %v93 = vrot.slane %v81, %v92
    %v95 = vunpack.c.l.s4 1983009808
    %v96 = vunpack.c.0.s8 %v95
    %v97 = vlaneseq
    %v98 = vshrl.u32 %v97, 7
    %v99 = vsub.s32 %v96, %v98
    %v100 = vrot.slane %v86, %v99
    %v101 = vcombine.high %v93, %v93
    %v102 = vcombine.high %v100, %v100
    %v103 = vcombine.high %v82, %v82
    %v105 = vunpack.c.l.s4 1983009808
    %v106 = vunpack.c.0.s8 %v105
    %v107 = vlaneseq
    %v108 = vshrl.u32 %v107, 7
    %v109 = vsub.s32 %v106, %v108
    %v110 = vrot.slane %v82, %v109
    %v112 = vunpack.c.l.s4 1983009808
    %v113 = vunpack.c.0.s8 %v112
    %v114 = vlaneseq
    %v115 = vshrl.u32 %v114, 7
    %v116 = vsub.s32 %v113, %v115
    %v117 = vrot.slane %v103, %v116
    %v118 = vcombine.high %v110, %v110
    %v119 = vcombine.high %v117, %v117
    %vm128 = vcmask 1041408
    %v129 = vsel %vm128, %v93, 0.0
    %v130 = vsel %vm128, %v101, 0.0
    %v131 = vadd.f32 %v129, %v130
    %v132 = vsel %vm128, %v100, 0.0
    %v133 = vadd.f32 %v131, %v132
    %v134 = vsel %vm128, %v102, 0.0
    %v135 = vadd.f32 %v133, %v134
    %v136 = vsel %vm128, %v110, 0.0
    %v137 = vadd.f32 %v135, %v136
    %v138 = vsel %vm128, %v118, 0.0
    %v139 = vadd.f32 %v137, %v138
    %v140 = vsel %vm128, %v117, 0.0
    %v141 = vadd.f32 %v139, %v140
    %v142 = vsel %vm128, %v119, 0.0
    %v143 = vadd.f32 %v141, %v142
    %144 = vadd.xlane.f32.xlu0 %v143
    %v145 = vpop.xlane.xlu0 %144
    %v146 = vadd.f32 %v83, %v145
    %vm147 = vcmask 1024
    %148 = vst.msk [vmem:[%s2] sm:$0x3] %vm147, %v146
    // Predicated region
    $region22: #{tpu_custom_call.1} parent=1 // pred_check
      _
    $region23: #{tpu_custom_call.1} parent=1 // pred_check_branch
      %150 = sbr.rel (0) target = $region25
    $region24: #{tpu_custom_call.1} parent=1 // pred_region
      _
    $region25: #{tpu_custom_call.1} parent=1 // pred_fallthru
      _
    // Predicated region
    $region26: #{tpu_custom_call.1} parent=1 // pred_check
      _
    $region27: #{tpu_custom_call.1} parent=1 // pred_check_branch
      %152 = sbr.rel (0) target = $region29
    $region28: #{tpu_custom_call.1} parent=1 // pred_region
      _
    $region29: #{tpu_custom_call.1} parent=1 // pred_fallthru
      _
    %153 = vsyncpa [#allocation3], 1
    %154 = vsyncpa [#allocation5], 1

</llo_original>
